<compile_context>
chip_gen: v6e
topology: v6e:2x2x1
jax: 0.10.0
libtpu: 0.0.40
codegen_flags: <defaults>
</compile_context>

<pallas_src>
import jax
import jax.numpy as jnp
from jax.experimental import pallas as pl
from jax.experimental.pallas import tpu as pltpu


def _round_up(x, m):
    return ((x + m - 1) // m) * m


def _pick_tn(n_total):
    """Pick a lane-tile width: multiple of 128, <= 2048, dividing n_total.

    Prefers >= 2 feature tiles (megacore-shardable) when the array is wide
    enough to keep each tile >= ~512 lanes.
    """
    m = n_total // 128
    divs = [d for d in range(1, min(m, 16) + 1) if m % d == 0]
    best = max(divs)
    if m // best == 1 and m >= 8:
        # Single wide tile but array is wide enough to split across 2 TCs.
        cands = [d for d in divs if m // d >= 2]
        if cands:
            best = max(cands)
    return 128 * best


def _make_kernel(S, ts, tn, needs_mask):
    def kernel(embed_ref, inv_ref, out_ref, acc_ref):
        """Grid = (n_tiles, s_tiles); s (last axis) is the sequence reduction.

        embed_ref : (ts, tn) block of the flattened (S, N) input
        inv_ref   : (1, tn) precomputed 1/length broadcast row
        out_ref   : (1, tn) output row (VMEM-resident across the s axis)
        acc_ref   : (8, tn) float32 partial-sum accumulator scratch
        """
        s = pl.program_id(1)

        @pl.when(s == 0)
        def _init():
            acc_ref[...] = jnp.zeros_like(acc_ref)

        x = embed_ref[...].astype(jnp.float32)

        if needs_mask:
            # Ragged last sequence tile: zero the out-of-range rows.
            rows_left = S - s * ts
            row_id = jax.lax.broadcasted_iota(jnp.int32, (ts, 1), 0)
            x = jnp.where(row_id < rows_left, x, 0.0)

        if ts % 8 == 0:
            # Pure VPU adds per step: (ts, tn) -> (8, tn) partial sums.
            acc_ref[...] += x.reshape(ts // 8, 8, tn).sum(axis=0)
        else:
            # Only happens for a single full-extent sequence tile (ts == S).
            acc_ref[pl.ds(0, 1), :] = (
                acc_ref[pl.ds(0, 1), :] + jnp.sum(x, axis=0, keepdims=True)
            )

        @pl.when(s == pl.num_programs(1) - 1)
        def _finalize():
            # One cross-sublane 8->1 reduce per n-tile, then scale by 1/length.
            total = jnp.sum(acc_ref[...], axis=0, keepdims=True)
            out_ref[...] = (total * inv_ref[...]).astype(out_ref.dtype)

    return kernel


def baseline_forward(embed, length, *, budget_bytes=8 * 1024 * 1024):
    """embed: (S, B, D), length: (B,) -> (B, D) float32."""
    S, B, D = embed.shape
    N = B * D
    dtype_bytes = jnp.dtype(embed.dtype).itemsize
    sub = 8 * max(1, 4 // dtype_bytes)  # sublane packing: 8 f32 / 16 bf16 / 32 int8

    # ---- feature axis: avoid padding passes wherever possible --------------
    if N % 128 == 0:
        n_total = N
        tn = _pick_tn(n_total)
    elif budget_bytes // (N * dtype_bytes) >= sub:
        # Ragged lane edge but a full-width (fully contiguous DMA) tile still
        # leaves room for >= `sub` rows per step: use it and skip the pad pass.
        n_total = N
        tn = N
    else:
        # Huge, non-128-aligned N: pad to the next multiple of 128 (<128 lanes
        # of waste) so we can tile the lane axis.
        n_total = _round_up(N, 128)
        tn = _pick_tn(n_total)

    x = embed.reshape(S, N)
    inv_len = 1.0 / length.astype(jnp.float32)                       # (B,)
    inv_row = jnp.broadcast_to(inv_len[:, None], (B, D)).reshape(1, N)
    if n_total != N:
        x = jnp.pad(x, ((0, 0), (0, n_total - N)))
        inv_row = jnp.pad(inv_row, ((0, 0), (0, n_total - N)))

    # ---- sequence axis: NO wrapper pad; ragged last tile masked in-kernel --
    budget_rows = max(1, budget_bytes // (tn * dtype_bytes))
    if S <= budget_rows:
        ts = S                                  # single tile; full-dim block is legal
    else:
        ts = max(sub, (budget_rows // sub) * sub)
    s_tiles = -(-S // ts)                        # cdiv
    needs_mask = (S % ts) != 0

    grid = (n_total // tn, s_tiles)
    kernel = _make_kernel(S, ts, tn, needs_mask)

    cost = pl.CostEstimate(
        flops=S * n_total,
        transcendentals=0,
        bytes_accessed=S * n_total * dtype_bytes + 2 * n_total * 4,
    )

    out2d = pl.pallas_call(
        kernel,
        out_shape=jax.ShapeDtypeStruct((1, n_total), jnp.float32),
        grid_spec=pltpu.PrefetchScalarGridSpec(
            num_scalar_prefetch=0,
            grid=grid,
            in_specs=[
                # big (ts, tn) chunk of the flattened embed per step
                pl.BlockSpec((ts, tn), lambda n, s: (s, n)),
                # reciprocal-length row: same feature tile every s step
                pl.BlockSpec((1, tn), lambda n, s: (0, n)),
            ],
            out_specs=pl.BlockSpec((1, tn), lambda n, s: (0, n)),
            scratch_shapes=[pltpu.VMEM((8, tn), jnp.float32)],
        ),
        compiler_params=pltpu.CompilerParams(
            # feature tiles are independent (megacore-shardable on v7x);
            # sequence axis is the reduction.
            dimension_semantics=("parallel", "arbitrary"),
            vmem_limit_bytes=48 * 1024 * 1024,
        ),
        cost_estimate=cost,
    )(x, inv_row)

    return out2d[0, :N].reshape(B, D)


if __name__ == "__main__":
    key = jax.random.PRNGKey(0)
    S, B, D = 8, 2, 32  # seq_len, batch, embed_dim

    k_embed, _ = jax.random.split(key)
    embed = jax.random.normal(k_embed, (S, B, D), dtype=jnp.float32)
    length = jnp.array([5, 8], dtype=jnp.int32)  # per-example sequence lengths

    out = baseline_forward(embed, length)
    out = jax.block_until_ready(out)

    # reference check in plain JAX (mirrors the torch forward exactly)
    ref = jnp.sum(embed, axis=0) / length.astype(jnp.float32)[:, None]
    assert out.shape == (B, D)
    assert jnp.allclose(out, ref, atol=1e-5, rtol=1e-5)

    print("KERNEL_OK")
</pallas_src>

<mosaic_0001>
module attributes {stable_mosaic.version = 11 : i64} {
  func.func @kernel(%arg0: i32, %arg1: i32, %arg2: memref<8x64xf32, #tpu.memory_space<vmem>>, %arg3: memref<1x64xf32, #tpu.memory_space<vmem>>, %arg4: memref<1x64xf32, #tpu.memory_space<vmem>>, %arg5: memref<8x64xf32, #tpu.memory_space<vmem>>) attributes {dimension_semantics = [#tpu.dimension_semantics<parallel>, #tpu.dimension_semantics<arbitrary>], iteration_bounds = array<i64: 1, 1>, scalar_prefetch = 0 : i64, scratch_operands = 1 : i64, tpu.core_type = #tpu.core_type<tc>, window_params = [{transform_indices = @transform_0, window_bounds = array<i64: 8, 64>}, {transform_indices = @transform_1, window_bounds = array<i64: 1, 64>}, {transform_indices = @transform_2, window_bounds = array<i64: 1, 64>}]} {
    %c0_i32 = arith.constant 0 : i32
    %0 = arith.cmpi eq, %arg1, %c0_i32 : i32
    %1 = arith.extui %0 : i1 to i32
    %c0_i32_0 = arith.constant 0 : i32
    %2 = arith.cmpi ne, %1, %c0_i32_0 : i32
    scf.if %2 {
      %cst_8 = arith.constant 0.000000e+00 : f32
      %12 = vector.broadcast %cst_8 : f32 to vector<8x64xf32>
      %c0_9 = arith.constant 0 : index
      %c0_10 = arith.constant 0 : index
      %13 = vector.load %arg5[%c0_9, %c0_10] : memref<8x64xf32, #tpu.memory_space<vmem>>, vector<8x64xf32>
      tpu.vector_store %arg5[%c0_9, %c0_10], %12 {strides = array<i32>} : memref<8x64xf32, #tpu.memory_space<vmem>>, vector<8x64xf32>,
    } else {
    }
    %c0 = arith.constant 0 : index
    %c0_1 = arith.constant 0 : index
    %3 = vector.load %arg2[%c0, %c0_1] : memref<8x64xf32, #tpu.memory_space<vmem>>, vector<8x64xf32>
    %c0_2 = arith.constant 0 : index
    %c0_3 = arith.constant 0 : index
    %4 = vector.load %arg5[%c0_2, %c0_3] : memref<8x64xf32, #tpu.memory_space<vmem>>, vector<8x64xf32>
    %5 = vector.shape_cast %3 : vector<8x64xf32> to vector<1x8x64xf32>
    %cst = arith.constant dense<0.000000e+00> : vector<8x64xf32>
    %6 = vector.multi_reduction <add>, %5, %cst [0] : vector<1x8x64xf32> to vector<8x64xf32>
    %7 = arith.addf %4, %6 : vector<8x64xf32>
    %c0_4 = arith.constant 0 : index
    %c0_5 = arith.constant 0 : index
    %8 = vector.load %arg5[%c0_4, %c0_5] : memref<8x64xf32, #tpu.memory_space<vmem>>, vector<8x64xf32>
    tpu.vector_store %arg5[%c0_4, %c0_5], %7 {strides = array<i32>} : memref<8x64xf32, #tpu.memory_space<vmem>>, vector<8x64xf32>,
    %c0_i32_6 = arith.constant 0 : i32
    %9 = arith.cmpi eq, %arg1, %c0_i32_6 : i32
    %10 = arith.extui %9 : i1 to i32
    %c0_i32_7 = arith.constant 0 : i32
    %11 = arith.cmpi ne, %10, %c0_i32_7 : i32
    scf.if %11 {
      %c0_8 = arith.constant 0 : index
      %c0_9 = arith.constant 0 : index
      %12 = vector.load %arg5[%c0_8, %c0_9] : memref<8x64xf32, #tpu.memory_space<vmem>>, vector<8x64xf32>
      %cst_10 = arith.constant dense<0.000000e+00> : vector<64xf32>
      %13 = vector.multi_reduction <add>, %12, %cst_10 [0] : vector<8x64xf32> to vector<64xf32>
      %14 = vector.shape_cast %13 : vector<64xf32> to vector<1x64xf32>
      %c0_11 = arith.constant 0 : index
      %c0_12 = arith.constant 0 : index
      %15 = vector.load %arg3[%c0_11, %c0_12] : memref<1x64xf32, #tpu.memory_space<vmem>>, vector<1x64xf32>
      %16 = arith.mulf %14, %15 : vector<1x64xf32>
      %c0_13 = arith.constant 0 : index
      %c0_14 = arith.constant 0 : index
      %17 = vector.load %arg4[%c0_13, %c0_14] : memref<1x64xf32, #tpu.memory_space<vmem>>, vector<1x64xf32>
      tpu.vector_store %arg4[%c0_13, %c0_14], %16 {strides = array<i32>} : memref<1x64xf32, #tpu.memory_space<vmem>>, vector<1x64xf32>,
    } else {
    }
    return
  }
  func.func @transform_0(%arg0: i32, %arg1: i32) -> (i32, i32) {
    %c0_i32 = arith.constant 0 : i32
    return %arg1, %arg0 : i32, i32
  }
  func.func @transform_1(%arg0: i32, %arg1: i32) -> (i32, i32) {
    %c0_i32 = arith.constant 0 : i32
    %c0_i32_0 = arith.constant 0 : i32
    return %c0_i32, %arg0 : i32, i32
  }
  func.func @transform_2(%arg0: i32, %arg1: i32) -> (i32, i32) {
    %c0_i32 = arith.constant 0 : i32
    %c0_i32_0 = arith.constant 0 : i32
    return %c0_i32, %arg0 : i32, i32
  }
}

</mosaic_0001>

<llo_original>
// kernel: tpu_custom_call.1
$region0: #{tpu_custom_call.1}
  #allocation0 [shape = 'u32[]', space=smem, size = 0x4, offset = 0x4, fixed_abs, tag = 'smem constant byte address 0x4 - core index']
  #allocation1 [shape = 'u32[144,128]{1,0:T(1,128)}', space=vmem, size = 0x12000, scoped, tag = 'internal scratch']
  #allocation2 [shape = 'f32[8,64]{1,0:T(8,128)}', space=vmem, size = 0x1000, scoped, tag = 'scratch operand']
  %s0 = inlined_call_operand.hbm [shape: f32[8,64], index: 0, kind: input, shape index: {}]
  %s1 = inlined_call_operand.vmem [shape: f32[1,64], index: 1, kind: input, shape index: {}]
  %s2 = inlined_call_operand.hbm [shape: f32[1,64], index: 2, kind: output, shape index: {}]
  %s3 = sld [smem:[#allocation0]]
  $region30: #{tpu_custom_call.1} parent=0
    _
  %s5 = ssub.s32 1, %s3
  %s6 = scalar_select 0, %s5, %s3
  $region1: #{tpu_custom_call.1} parent=0
    #allocation3 [shape = 'u8[4096]{0}', space=vmem, size = 0x1000, scoped, tag = 'input window, operand 0, single buffered']
    #allocation4 [shape = 's32[1]{0}', space=sflag, size = 0x4, scoped, tag = 'scoped memory for tpu_custom_call.1']
    #allocation5 [shape = 's32[1]{0}', space=sflag, size = 0x4, scoped, tag = 'scoped memory for tpu_custom_call.1']
    #allocation6 [shape = 'u8[512]{0}', space=vmem, size = 0x400, scoped, tag = 'output window, operand 0, single buffered']
    %7 = vsyncpa [#allocation4], 0
    %8 = vsyncpa [#allocation5], 0
    // Predicated region
    $region2: #{tpu_custom_call.1} parent=1 // pred_check
      _
    $region3: #{tpu_custom_call.1} parent=1 // pred_check_branch
      %10 = sbr.rel (0) target = $region5
    $region4: #{tpu_custom_call.1} parent=1 // pred_region
      %s12 = ssub.s32 128, 128
      %13 = vsyncadd [#allocation4], %s12
      %s15 = sshll.u32 [#allocation3], 4
      %s16 = int_to_ptr.vmem [resolvable:$true] %s15
      %18 = dma.hbm_to_vmem [thread:$0]  %s0, 128, %s16, [#allocation4]
    $region5: #{tpu_custom_call.1} parent=1 // pred_fallthru
      _
    // Predicated region
    $region6: #{tpu_custom_call.1} parent=1 // pred_check
      _
    $region7: #{tpu_custom_call.1} parent=1 // pred_check_branch
      %20 = sbr.rel (0) target = $region9
    $region8: #{tpu_custom_call.1} parent=1 // pred_region
      _
    $region9: #{tpu_custom_call.1} parent=1 // pred_fallthru
      _
    // Predicated region
    $region10: #{tpu_custom_call.1} parent=1 // pred_check
      _
    $region11: #{tpu_custom_call.1} parent=1 // pred_check_branch
      %22 = sbr.rel (0) target = $region13
    $region12: #{tpu_custom_call.1} parent=1 // pred_region
      %23 = dma.done [#allocation4], 128
    $region13: #{tpu_custom_call.1} parent=1 // pred_fallthru
      _
    %p24 = scmp.eq.s32.totalorder 0, 0
    // Predicated region
    $region14: #{tpu_custom_call.1} parent=1 // pred_check
      %p25 = pneg %p24
    $region15: #{tpu_custom_call.1} parent=1 // pred_check_branch
      %27 = sbr.rel (%p25) target = $region17
    $region16: #{tpu_custom_call.1} parent=1 // pred_region
      %vm28 = vcmask 523264
      %29 = vst.msk [vmem:[#allocation2] sm:$0xff] %vm28, 0.0
    $region17: #{tpu_custom_call.1} parent=1 // pred_fallthru
      _
    %v30 = vld [vmem:[#allocation3] sm:$0xff]
    %v31 = vld [vmem:[#allocation2] sm:$0xff]
    %v32 = vadd.f32 %v30, 0.0
    %v33 = vadd.f32 %v31, %v32
    %vm34 = vcmask 523264
    %35 = vst.msk [vmem:[#allocation2] sm:$0xff] %vm34, %v33
    // Predicated region
    $region18: #{tpu_custom_call.1} parent=1 // pred_check
      %p36 = pneg %p24
    $region19: #{tpu_custom_call.1} parent=1 // pred_check_branch
      %38 = sbr.rel (%p36) target = $region21
    $region20: #{tpu_custom_call.1} parent=1 // pred_region
      %v39 = vld [vmem:[#allocation2] sm:$0xff]
      %v40 = vsel %vm34, %v39, 0.0
      %v41 = vrot.slane %v40, 4
      %v42 = vadd.f32 %v40, %v41
      %v43 = vrot.slane %v42, 2
      %v44 = vadd.f32 %v42, %v43
      %v45 = vrot.slane %v44, 1
      %v46 = vadd.f32 %v44, %v45
      %v47 = vld [vmem:[%s1] sm:$0x1]
      %v48 = vmul.f32 %v46, %v47
      %vm49 = vcmask 516096
      %50 = vst.msk [vmem:[#allocation6] sm:$0x1] %vm49, %v48
    $region21: #{tpu_custom_call.1} parent=1 // pred_fallthru
      _
    // Predicated region
    $region22: #{tpu_custom_call.1} parent=1 // pred_check
      _
    $region23: #{tpu_custom_call.1} parent=1 // pred_check_branch
      %52 = sbr.rel (0) target = $region25
    $region24: #{tpu_custom_call.1} parent=1 // pred_region
      %s54 = ssub.s32 16, 16
      %55 = vsyncadd [#allocation5], %s54
      %s57 = sshll.u32 [#allocation6], 4
      %s58 = int_to_ptr.vmem [resolvable:$true] %s57
      %60 = dma.vmem_to_hbm [thread:$0]  %s58, 16, %s2, [#allocation5]
    $region25: #{tpu_custom_call.1} parent=1 // pred_fallthru
      _
    // Predicated region
    $region26: #{tpu_custom_call.1} parent=1 // pred_check
      _
    $region27: #{tpu_custom_call.1} parent=1 // pred_check_branch
      %62 = sbr.rel (0) target = $region29
    $region28: #{tpu_custom_call.1} parent=1 // pred_region
      %63 = dma.done [#allocation5], 16
    $region29: #{tpu_custom_call.1} parent=1 // pred_fallthru
      _
    %64 = vsyncpa [#allocation4], 1
    %65 = vsyncpa [#allocation5], 1

</llo_original>
